<compile_context>
chip_gen: v5e
topology: v5e:2x2
jax: 0.10.0
libtpu: 0.0.40
codegen_flags: <defaults>
</compile_context>

<pallas_src>
import functools

import jax
import jax.numpy as jnp
from jax.experimental import pallas as pl
from jax.experimental.pallas import tpu as pltpu


# ---------------------------------------------------------------------------
# Phase 1: channel gate  z = sigmoid(W2 @ relu(W1 @ mean_hw(x) + b1) + b2)
# ---------------------------------------------------------------------------
def _gate_kernel(x_ref, w1_ref, b1_ref, w2_ref, b2_ref, z_ref, acc_ref, *, inv_hw):
    # x_ref: (1, C, T)  w1_ref: (Cr, C)  b1_ref: (Cr, 1)  w2_ref: (C, Cr)
    # b2_ref: (C, 1)    z_ref: (1, C, 1) acc_ref: (C, 1) VMEM scratch
    t = pl.program_id(1)

    @pl.when(t == 0)
    def _():
        acc_ref[...] = jnp.zeros_like(acc_ref)

    x = x_ref[0]                                              # (C, T)
    acc_ref[...] += jnp.sum(x, axis=1, keepdims=True)         # (C, 1) partial sum

    @pl.when(t == pl.num_programs(1) - 1)
    def _():
        pooled = acc_ref[...] * inv_hw                        # (C, 1) global avg pool
        h = jnp.dot(w1_ref[...], pooled,
                    preferred_element_type=jnp.float32) + b1_ref[...]   # (Cr, 1)
        h = jnp.maximum(h, 0.0)
        zc = jnp.dot(w2_ref[...], h,
                     preferred_element_type=jnp.float32) + b2_ref[...]  # (C, 1)
        z_ref[0] = jax.nn.sigmoid(zc)


# ---------------------------------------------------------------------------
# Phase 2: streaming apply  out = x * (sigmoid(ws @ x) + z)
# ---------------------------------------------------------------------------
def _apply_kernel(x_ref, ws_ref, z_ref, o_ref):
    # x_ref: (1, C, T)  ws_ref: (1, C)  z_ref: (1, C, 1)  o_ref: (1, C, T)
    x = x_ref[0]                                              # (C, T)
    zs = jnp.dot(ws_ref[...], x,
                 preferred_element_type=jnp.float32)          # (1, T) spatial logits
    gate = jax.nn.sigmoid(zs) + z_ref[0]                      # (1,T)+(C,1) -> (C, T)
    o_ref[0] = (x * gate).astype(o_ref.dtype)


def _choose_hw_tile(C, HW, per_buffer_bytes=4 * 1024 * 1024):
    """Pick a lane tile (multiple of 128) whose (C, T) f32 buffer is <= per_buffer_bytes."""
    hw_up = ((HW + 127) // 128) * 128
    t_cap = (per_buffer_bytes // (C * 4)) // 128 * 128
    t_cap = max(128, t_cap)
    return min(hw_up, t_cap)


def scse_pallas(x_nchw, ws, w1, b1, w2, b2):
    """x_nchw: [N, C, H, W] f32. Weights: ws (1,C), w1 (Cr,C), b1 (1,Cr), w2 (C,Cr), b2 (1,C)."""
    N, C, H, W = x_nchw.shape
    HW = H * W
    Cr = w1.shape[0]

    # Biases as column vectors so no per-iteration transposes inside the kernel.
    b1c = b1.reshape(Cr, 1)
    b2c = b2.reshape(C, 1)

    T = _choose_hw_tile(C, HW)
    num_tiles = (HW + T - 1) // T
    HW_pad = num_tiles * T

    x = x_nchw.reshape(N, C, HW)
    if HW_pad != HW:
        # Zero pad: contributes 0 to the pooled sum; padded outputs are sliced off.
        x = jnp.pad(x, ((0, 0), (0, 0), (0, HW_pad - HW)))

    vmem_limit = 48 * 1024 * 1024  # under v7x's 64 MiB physical, with headroom

    # ---- phase 1: channel gate z (N, C, 1) ----------------------------------
    z = pl.pallas_call(
        functools.partial(_gate_kernel, inv_hw=1.0 / HW),
        out_shape=jax.ShapeDtypeStruct((N, C, 1), jnp.float32),
        grid_spec=pltpu.PrefetchScalarGridSpec(
            num_scalar_prefetch=0,
            grid=(N, num_tiles),
            in_specs=[
                pl.BlockSpec((1, C, T), lambda n, t: (n, 0, t)),
                pl.BlockSpec((Cr, C), lambda n, t: (0, 0)),
                pl.BlockSpec((Cr, 1), lambda n, t: (0, 0)),
                pl.BlockSpec((C, Cr), lambda n, t: (0, 0)),
                pl.BlockSpec((C, 1), lambda n, t: (0, 0)),
            ],
            out_specs=pl.BlockSpec((1, C, 1), lambda n, t: (n, 0, 0)),
            scratch_shapes=[pltpu.VMEM((C, 1), jnp.float32)],
        ),
        compiler_params=pltpu.CompilerParams(
            dimension_semantics=("parallel", "arbitrary"),
            vmem_limit_bytes=vmem_limit,
        ),
    )(x, w1, b1c, w2, b2c)

    # ---- phase 2: streaming apply over (N, HW tiles) -------------------------
    out = pl.pallas_call(
        _apply_kernel,
        out_shape=jax.ShapeDtypeStruct((N, C, HW_pad), x.dtype),
        grid_spec=pltpu.PrefetchScalarGridSpec(
            num_scalar_prefetch=0,
            grid=(N, num_tiles),
            in_specs=[
                pl.BlockSpec((1, C, T), lambda n, t: (n, 0, t)),
                pl.BlockSpec((1, C), lambda n, t: (0, 0)),
                pl.BlockSpec((1, C, 1), lambda n, t: (n, 0, 0)),
            ],
            out_specs=pl.BlockSpec((1, C, T), lambda n, t: (n, 0, t)),
        ),
        compiler_params=pltpu.CompilerParams(
            dimension_semantics=("parallel", "parallel"),
            vmem_limit_bytes=vmem_limit,
        ),
    )(x, ws, z)

    if HW_pad != HW:
        out = out[:, :, :HW]
    return out.reshape(N, C, H, W)


def scse_reference(x, ws, w1, b1, w2, b2):
    """Pure-JAX reference mirroring the PyTorch module."""
    # spatial attention
    zs = jnp.einsum("nchw,c->nhw", x, ws[0])[:, None, :, :]      # (N,1,H,W)
    satt = x * jax.nn.sigmoid(zs)
    # channel attention
    pooled = jnp.mean(x, axis=(2, 3))                            # (N,C)
    h = jnp.maximum(pooled @ w1.T + b1[0], 0.0)                  # (N,Cr)
    z = jax.nn.sigmoid(h @ w2.T + b2[0])                         # (N,C)
    catt = x * z[:, :, None, None]
    return satt + catt


if __name__ == "__main__":
    N, C, H, W = 2, 4, 16, 16
    reduction = 4
    Cr = C // reduction

    key = jax.random.PRNGKey(0)
    kx, k1, k2, k3, k4, k5 = jax.random.split(key, 6)

    x = jax.random.normal(kx, (N, C, H, W), dtype=jnp.float32)

    # Deterministic synthetic parameters (PyTorch 1x1-conv weights squeezed to 2D).
    ws = jax.random.normal(k1, (1, C), dtype=jnp.float32) * 0.5          # squeeze conv (no bias)
    w1 = jax.random.normal(k2, (Cr, C), dtype=jnp.float32) * 0.5         # GAB conv1 weight
    b1 = jax.random.normal(k3, (1, Cr), dtype=jnp.float32) * 0.1         # GAB conv1 bias
    w2 = jax.random.normal(k4, (C, Cr), dtype=jnp.float32) * 0.5         # GAB conv2 weight
    b2 = jax.random.normal(k5, (1, C), dtype=jnp.float32) * 0.1          # GAB conv2 bias

    out = scse_pallas(x, ws, w1, b1, w2, b2)
    jax.block_until_ready(out)

    ref = scse_reference(x, ws, w1, b1, w2, b2)
    assert out.shape == (N, C, H, W)
    assert jnp.allclose(out, ref, atol=1e-5, rtol=1e-5), "Pallas output mismatch vs reference"

    print("KERNEL_OK")
</pallas_src>

<mosaic_0001>
module attributes {stable_mosaic.version = 11 : i64} {
  func.func @_gate_kernel(%arg0: i32, %arg1: i32, %arg2: memref<1x4x256xf32, #tpu.memory_space<vmem>>, %arg3: memref<1x4xf32, #tpu.memory_space<vmem>>, %arg4: memref<1x1xf32, #tpu.memory_space<vmem>>, %arg5: memref<4x1xf32, #tpu.memory_space<vmem>>, %arg6: memref<4x1xf32, #tpu.memory_space<vmem>>, %arg7: memref<1x4x1xf32, #tpu.memory_space<vmem>>, %arg8: memref<4x1xf32, #tpu.memory_space<vmem>>) attributes {dimension_semantics = [#tpu.dimension_semantics<parallel>, #tpu.dimension_semantics<arbitrary>], iteration_bounds = array<i64: 2, 1>, scalar_prefetch = 0 : i64, scratch_operands = 1 : i64, tpu.core_type = #tpu.core_type<tc>, window_params = [{transform_indices = @transform_0, window_bounds = array<i64: 1, 4, 256>}, {pipeline_mode = #tpu.pipeline_mode<synchronous>, transform_indices = @transform_1, window_bounds = array<i64: 1, 4>}, {pipeline_mode = #tpu.pipeline_mode<synchronous>, transform_indices = @transform_2, window_bounds = array<i64: 1, 1>}, {pipeline_mode = #tpu.pipeline_mode<synchronous>, transform_indices = @transform_3, window_bounds = array<i64: 4, 1>}, {pipeline_mode = #tpu.pipeline_mode<synchronous>, transform_indices = @transform_4, window_bounds = array<i64: 4, 1>}, {transform_indices = @transform_5, window_bounds = array<i64: 1, 4, 1>}]} {
    %c0_i32 = arith.constant 0 : i32
    %0 = arith.cmpi eq, %arg1, %c0_i32 : i32
    %1 = arith.extui %0 : i1 to i32
    %c0_i32_0 = arith.constant 0 : i32
    %2 = arith.cmpi ne, %1, %c0_i32_0 : i32
    scf.if %2 {
      %cst_9 = arith.constant 0.000000e+00 : f32
      %13 = vector.broadcast %cst_9 : f32 to vector<4x1xf32>
      %c0_10 = arith.constant 0 : index
      %c0_11 = arith.constant 0 : index
      %14 = vector.load %arg8[%c0_10, %c0_11] : memref<4x1xf32, #tpu.memory_space<vmem>>, vector<4x1xf32>
      tpu.vector_store %arg8[%c0_10, %c0_11], %13 {strides = array<i32>} : memref<4x1xf32, #tpu.memory_space<vmem>>, vector<4x1xf32>,
    } else {
    }
    %c0 = arith.constant 0 : index
    %c0_1 = arith.constant 0 : index
    %c0_2 = arith.constant 0 : index
    %3 = vector.load %arg2[%c0, %c0_1, %c0_2] : memref<1x4x256xf32, #tpu.memory_space<vmem>>, vector<1x4x256xf32>
    %4 = vector.shape_cast %3 : vector<1x4x256xf32> to vector<4x256xf32>
    %c0_3 = arith.constant 0 : index
    %c0_4 = arith.constant 0 : index
    %5 = vector.load %arg8[%c0_3, %c0_4] : memref<4x1xf32, #tpu.memory_space<vmem>>, vector<4x1xf32>
    %cst = arith.constant dense<0.000000e+00> : vector<4xf32>
    %6 = vector.multi_reduction <add>, %4, %cst [1] : vector<4x256xf32> to vector<4xf32>
    %7 = vector.shape_cast %6 : vector<4xf32> to vector<4x1xf32>
    %8 = arith.addf %5, %7 : vector<4x1xf32>
    %c0_5 = arith.constant 0 : index
    %c0_6 = arith.constant 0 : index
    %9 = vector.load %arg8[%c0_5, %c0_6] : memref<4x1xf32, #tpu.memory_space<vmem>>, vector<4x1xf32>
    tpu.vector_store %arg8[%c0_5, %c0_6], %8 {strides = array<i32>} : memref<4x1xf32, #tpu.memory_space<vmem>>, vector<4x1xf32>,
    %c0_i32_7 = arith.constant 0 : i32
    %10 = arith.cmpi eq, %arg1, %c0_i32_7 : i32
    %11 = arith.extui %10 : i1 to i32
    %c0_i32_8 = arith.constant 0 : i32
    %12 = arith.cmpi ne, %11, %c0_i32_8 : i32
    scf.if %12 {
      %c0_9 = arith.constant 0 : index
      %c0_10 = arith.constant 0 : index
      %13 = vector.load %arg8[%c0_9, %c0_10] : memref<4x1xf32, #tpu.memory_space<vmem>>, vector<4x1xf32>
      %cst_11 = arith.constant 3.906250e-03 : f32
      %14 = vector.broadcast %cst_11 : f32 to vector<4x1xf32>
      %15 = arith.mulf %13, %14 : vector<4x1xf32>
      %c0_12 = arith.constant 0 : index
      %c0_13 = arith.constant 0 : index
      %16 = vector.load %arg3[%c0_12, %c0_13] : memref<1x4xf32, #tpu.memory_space<vmem>>, vector<1x4xf32>
      %cst_14 = arith.constant dense<0.000000e+00> : vector<1x1xf32>
      %17 = tpu.matmul %16, %15, %cst_14 {dimension_numbers = #tpu.dot_dimension_numbers<[1], [0], [0], [1], [0, 0, 1, 1], [], []>} : vector<1x4xf32>, vector<4x1xf32>, vector<1x1xf32> -> vector<1x1xf32>
      %c0_15 = arith.constant 0 : index
      %c0_16 = arith.constant 0 : index
      %18 = vector.load %arg4[%c0_15, %c0_16] : memref<1x1xf32, #tpu.memory_space<vmem>>, vector<1x1xf32>
      %19 = arith.addf %17, %18 : vector<1x1xf32>
      %cst_17 = arith.constant 0.000000e+00 : f32
      %20 = vector.broadcast %cst_17 : f32 to vector<1x1xf32>
      %21 = arith.maximumf %19, %20 : vector<1x1xf32>
      %c0_18 = arith.constant 0 : index
      %c0_19 = arith.constant 0 : index
      %22 = vector.load %arg5[%c0_18, %c0_19] : memref<4x1xf32, #tpu.memory_space<vmem>>, vector<4x1xf32>
      %cst_20 = arith.constant dense<0.000000e+00> : vector<4x1xf32>
      %23 = tpu.matmul %22, %21, %cst_20 {dimension_numbers = #tpu.dot_dimension_numbers<[1], [0], [0], [1], [0, 0, 1, 1], [], []>} : vector<4x1xf32>, vector<1x1xf32>, vector<4x1xf32> -> vector<4x1xf32>
      %c0_21 = arith.constant 0 : index
      %c0_22 = arith.constant 0 : index
      %24 = vector.load %arg6[%c0_21, %c0_22] : memref<4x1xf32, #tpu.memory_space<vmem>>, vector<4x1xf32>
      %25 = arith.addf %23, %24 : vector<4x1xf32>
      %26 = arith.negf %25 : vector<4x1xf32>
      %27 = math.exp %26 : vector<4x1xf32>
      %cst_23 = arith.constant 1.000000e+00 : f32
      %28 = vector.broadcast %cst_23 : f32 to vector<4x1xf32>
      %29 = arith.addf %28, %27 : vector<4x1xf32>
      %30 = arith.divf %28, %29 : vector<4x1xf32>
      %c0_24 = arith.constant 0 : index
      %c0_25 = arith.constant 0 : index
      %c0_26 = arith.constant 0 : index
      %31 = vector.load %arg7[%c0_24, %c0_25, %c0_26] : memref<1x4x1xf32, #tpu.memory_space<vmem>>, vector<1x4x1xf32>
      %32 = vector.shape_cast %31 : vector<1x4x1xf32> to vector<4x1xf32>
      %33 = vector.shape_cast %30 : vector<4x1xf32> to vector<1x4x1xf32>
      tpu.vector_store %arg7[%c0_24, %c0_25, %c0_26], %33 {strides = array<i32>} : memref<1x4x1xf32, #tpu.memory_space<vmem>>, vector<1x4x1xf32>,
    } else {
    }
    return
  }
  func.func @transform_0(%arg0: i32, %arg1: i32) -> (i32, i32, i32) {
    %c0_i32 = arith.constant 0 : i32
    %c0_i32_0 = arith.constant 0 : i32
    return %arg0, %c0_i32, %arg1 : i32, i32, i32
  }
  func.func @transform_1(%arg0: i32, %arg1: i32) -> (i32, i32) {
    %c0_i32 = arith.constant 0 : i32
    %c0_i32_0 = arith.constant 0 : i32
    %c0_i32_1 = arith.constant 0 : i32
    return %c0_i32, %c0_i32_0 : i32, i32
  }
  func.func @transform_2(%arg0: i32, %arg1: i32) -> (i32, i32) {
    %c0_i32 = arith.constant 0 : i32
    %c0_i32_0 = arith.constant 0 : i32
    %c0_i32_1 = arith.constant 0 : i32
    return %c0_i32, %c0_i32_0 : i32, i32
  }
  func.func @transform_3(%arg0: i32, %arg1: i32) -> (i32, i32) {
    %c0_i32 = arith.constant 0 : i32
    %c0_i32_0 = arith.constant 0 : i32
    %c0_i32_1 = arith.constant 0 : i32
    return %c0_i32, %c0_i32_0 : i32, i32
  }
  func.func @transform_4(%arg0: i32, %arg1: i32) -> (i32, i32) {
    %c0_i32 = arith.constant 0 : i32
    %c0_i32_0 = arith.constant 0 : i32
    %c0_i32_1 = arith.constant 0 : i32
    return %c0_i32, %c0_i32_0 : i32, i32
  }
  func.func @transform_5(%arg0: i32, %arg1: i32) -> (i32, i32, i32) {
    %c0_i32 = arith.constant 0 : i32
    %c0_i32_0 = arith.constant 0 : i32
    %c0_i32_1 = arith.constant 0 : i32
    return %arg0, %c0_i32, %c0_i32_0 : i32, i32, i32
  }
}

</mosaic_0001>

<llo_original>
// kernel: tpu_custom_call.1
$region0: #{tpu_custom_call.1}
  #allocation0 [shape = 'u32[]', space=smem, size = 0x4, offset = 0x4, fixed_abs, tag = 'smem constant byte address 0x4 - core index']
  #allocation1 [shape = 'u32[72,128]{1,0:T(1,128)}', space=vmem, size = 0x9000, scoped, tag = 'internal scratch']
  #allocation2 [shape = 'f32[4,1]{1,0:T(4,128)}', space=vmem, size = 0x800, scoped, tag = 'scratch operand']
  #allocation3 [shape = 'f32[1,1]{1,0:T(1,128)S(1)}', space=vmem, size = 0x200, scoped, tag = 'scoped memory for tpu_custom_call.1']
  %s0 = inlined_call_operand.hbm [shape: f32[2,4,256], index: 0, kind: input, shape index: {}]
  %s1 = inlined_call_operand.vmem [shape: f32[1,4], index: 1, kind: input, shape index: {}]
  %s2 = inlined_call_operand.<no memory space> [shape: f32[1,1], index: 2, kind: input, shape index: {}]
  %s3 = inlined_call_operand.vmem [shape: f32[4,1], index: 3, kind: input, shape index: {}]
  %s4 = inlined_call_operand.vmem [shape: f32[4,1], index: 4, kind: input, shape index: {}]
  %s5 = inlined_call_operand.vmem [shape: f32[2,4,1], index: 5, kind: output, shape index: {}]
  %s6 = sld [smem:[#allocation0]]
  $region65: #{tpu_custom_call.1} parent=0
    _
  %s8 = ssub.s32 1, %s6
  %s9 = scalar_select 0, %s8, %s6
  %v10 = vstv %s2
  %11 = vst [vmem:[#allocation3] sm:$0x1] %v10
  $region1: #{tpu_custom_call.1} parent=0
    #allocation4 [shape = 'u8[8192]{0}', space=vmem, size = 0x2000, scoped, tag = 'input window, operand 0']
    #allocation5 [shape = 's32[2]{0}', space=sflag, size = 0x8, scoped, tag = 'scoped memory for tpu_custom_call.1']
    %12 = vsyncpa [#allocation5], 0
    %s13 = scalar_lea.sflag [#allocation5], 1
    %14 = vsyncpa %s13, 0
    loop: start=0, step=1, limit=4
    $region2: #{tpu_custom_call.1} parent=1 // loop_pre_header
      _
    $region3: #{tpu_custom_call.1} parent=1 // loop_header
      %s16 = sphi 0, %s20
      %p17 = scmp.ge.s32.totalorder %s16, 4
      %s23 = sphi 0, %s35
      %s24 = sphi 0, %s31
      %s25 = sphi 0, %s23
      %s26 = sphi 0, %s24
      %s27 = sphi 0, %s25
      %s28 = sphi 0, %s26
      %s40 = sphi 0, %s42
      %s43 = sphi 0, %s40
      %s44 = sphi 0, %s43
      %s60 = sphi 0, %s44
      %s64 = sphi 0, %s64
      %s66 = sphi 0, %s64
      %s67 = sphi 0, %s66
      %s81 = sphi 0, %s67
      %s85 = sphi 0, %s85
      %s87 = sphi 0, %s85
      %s88 = sphi 0, %s87
      %s102 = sphi 0, %s88
      %s106 = sphi 0, %s106
      %s108 = sphi 0, %s106
      %s109 = sphi 0, %s108
      %s123 = sphi 0, %s109
      %s127 = sphi 0, %s127
      %s129 = sphi 0, %s127
      %s130 = sphi 0, %s129
      %s144 = sphi 0, %s130
      %s150 = sphi 0, %s152
      %s153 = sphi 0, %s150
      %s154 = sphi 0, %s153
      %s170 = sphi 0, %s154
    $region4: #{tpu_custom_call.1} parent=1 // loop_header_branch
      %19 = sbr.rel (%p17) target = $region8
    $region5: #{tpu_custom_call.1} parent=1 // loop_body
      %s21 = ssub.s32 %s16, 1
      %s22 = ssub.s32 %s16, 2
      %s29 = sadd.s32 1, %s24
      %p30 = scmp.ge.s32.totalorder %s29, 1
      %s31 = scalar_select %p30, 0, %s29
      %s32 = sadd.s32 1, %s23
      %s33 = scalar_select %p30, %s32, %s23
      %p34 = scmp.ge.s32.totalorder %s33, 2
      %s35 = scalar_select %p34, 0, %s33
      %s36 = ssub.s32 %s23, %s35
      %s37 = ssub.s32 %s24, %s31
      %s38 = sor.u32 %s36, %s37
      %p39 = scmp.eq.s32.totalorder %s38, 0
      %s41 = sadd.s32 %s40, 1
      %s42 = scalar_select %p39, %s40, %s41
      %p45 = pneg %p39
      %p46 = scmp.eq.s32.totalorder %s16, 1
      %p47 = por %p45, %p46
      %p48 = scmp.ne.s32.totalorder %s40, %s43
      %p49 = scmp.eq.s32.totalorder %s16, 0
      %p50 = por %p48, %p49
      %p51 = scmp.ne.s32.totalorder %s40, %s43
      %p52 = scmp.eq.s32.totalorder %s21, 1
      %p53 = por %p51, %p52
      %p54 = scmp.ne.s32.totalorder %s43, %s44
      %p55 = scmp.eq.s32.totalorder %s21, 0
      %p56 = por %p54, %p55
      %p57 = scmp.ne.s32.totalorder %s43, %s44
      %p58 = scmp.eq.s32.totalorder %s22, 1
      %p59 = por %p57, %p58
      %p61 = scmp.ne.s32.totalorder %s44, %s60
      %p62 = scmp.eq.s32.totalorder %s22, 0
      %p63 = por %p61, %p62
      %s65 = sadd.s32 %s64, 1
      %p68 = scmp.eq.s32.totalorder %s16, 1
      %p69 = scmp.ne.s32.totalorder %s64, %s66
      %p70 = scmp.eq.s32.totalorder %s16, 0
      %p71 = por %p69, %p70
      %p72 = scmp.ne.s32.totalorder %s64, %s66
      %p73 = scmp.eq.s32.totalorder %s21, 1
      %p74 = por %p72, %p73
      %p75 = scmp.ne.s32.totalorder %s66, %s67
      %p76 = scmp.eq.s32.totalorder %s21, 0
      %p77 = por %p75, %p76
      %p78 = scmp.ne.s32.totalorder %s66, %s67
      %p79 = scmp.eq.s32.totalorder %s22, 1
      %p80 = por %p78, %p79
      %p82 = scmp.ne.s32.totalorder %s67, %s81
      %p83 = scmp.eq.s32.totalorder %s22, 0
      %p84 = por %p82, %p83
      %s86 = sadd.s32 %s85, 1
      %p89 = scmp.eq.s32.totalorder %s16, 1
      %p90 = scmp.ne.s32.totalorder %s85, %s87
      %p91 = scmp.eq.s32.totalorder %s16, 0
      %p92 = por %p90, %p91
      %p93 = scmp.ne.s32.totalorder %s85, %s87
      %p94 = scmp.eq.s32.totalorder %s21, 1
      %p95 = por %p93, %p94
      %p96 = scmp.ne.s32.totalorder %s87, %s88
      %p97 = scmp.eq.s32.totalorder %s21, 0
      %p98 = por %p96, %p97
      %p99 = scmp.ne.s32.totalorder %s87, %s88
      %p100 = scmp.eq.s32.totalorder %s22, 1
      %p101 = por %p99, %p100
      %p103 = scmp.ne.s32.totalorder %s88, %s102
      %p104 = scmp.eq.s32.totalorder %s22, 0
      %p105 = por %p103, %p104
      %s107 = sadd.s32 %s106, 1
      %p110 = scmp.eq.s32.totalorder %s16, 1
      %p111 = scmp.ne.s32.totalorder %s106, %s108
      %p112 = scmp.eq.s32.totalorder %s16, 0
      %p113 = por %p111, %p112
      %p114 = scmp.ne.s32.totalorder %s106, %s108
      %p115 = scmp.eq.s32.totalorder %s21, 1
      %p116 = por %p114, %p115
      %p117 = scmp.ne.s32.totalorder %s108, %s109
      %p118 = scmp.eq.s32.totalorder %s21, 0
      %p119 = por %p117, %p118
      %p120 = scmp.ne.s32.totalorder %s108, %s109
      %p121 = scmp.eq.s32.totalorder %s22, 1
      %p122 = por %p120, %p121
      %p124 = scmp.ne.s32.totalorder %s109, %s123
      %p125 = scmp.eq.s32.totalorder %s22, 0
      %p126 = por %p124, %p125
      %s128 = sadd.s32 %s127, 1
      %p131 = scmp.eq.s32.totalorder %s16, 1
      %p132 = scmp.ne.s32.totalorder %s127, %s129
      %p133 = scmp.eq.s32.totalorder %s16, 0
      %p134 = por %p132, %p133
      %p135 = scmp.ne.s32.totalorder %s127, %s129
      %p136 = scmp.eq.s32.totalorder %s21, 1
      %p137 = por %p135, %p136
      %p138 = scmp.ne.s32.totalorder %s129, %s130
      %p139 = scmp.eq.s32.totalorder %s21, 0
      %p140 = por %p138, %p139
      %p141 = scmp.ne.s32.totalorder %s129, %s130
      %p142 = scmp.eq.s32.totalorder %s22, 1
      %p143 = por %p141, %p142
      %p145 = scmp.ne.s32.totalorder %s130, %s144
      %p146 = scmp.eq.s32.totalorder %s22, 0
      %p147 = por %p145, %p146
      %s148 = ssub.s32 %s23, %s35
      %p149 = scmp.eq.s32.totalorder %s148, 0
      %s151 = sadd.s32 %s150, 1
      %s152 = scalar_select %p149, %s150, %s151
      %p155 = pneg %p149
      %p156 = scmp.eq.s32.totalorder %s16, 1
      %p157 = por %p155, %p156
      %p158 = scmp.ne.s32.totalorder %s150, %s153
      %p159 = scmp.eq.s32.totalorder %s16, 0
      %p160 = por %p158, %p159
      %p161 = scmp.ne.s32.totalorder %s150, %s153
      %p162 = scmp.eq.s32.totalorder %s21, 1
      %p163 = por %p161, %p162
      %p164 = scmp.ne.s32.totalorder %s153, %s154
      %p165 = scmp.eq.s32.totalorder %s21, 0
      %p166 = por %p164, %p165
      %p167 = scmp.ne.s32.totalorder %s153, %s154
      %p168 = scmp.eq.s32.totalorder %s22, 1
      %p169 = por %p167, %p168
      %p171 = scmp.ne.s32.totalorder %s154, %s170
      %p172 = scmp.eq.s32.totalorder %s22, 0
      %p173 = por %p171, %p172
      %p174 = scmp.le.s32.totalorder 1, %s16
      %p175 = scmp.lt.s32.totalorder %s16, 3
      %p176 = pnand %p174, %p175
      %p177 = pneg %p176
      // Predicated region
      $region9: #{tpu_custom_call.1} parent=5 // pred_check
        _
      $region10: #{tpu_custom_call.1} parent=5 // pred_check_branch
        %179 = sbr.rel (%p176) target = $region12
      $region11: #{tpu_custom_call.1} parent=5 // pred_region
        %s180 = ssub.s32 %s16, 1
        // Predicated region
        $region13: #{tpu_custom_call.1} parent=11 // pred_check
          %p181 = pneg %p77
        $region14: #{tpu_custom_call.1} parent=11 // pred_check_branch
          %183 = sbr.rel (%p181) target = $region16
        $region15: #{tpu_custom_call.1} parent=11 // pred_region
          _
        $region16: #{tpu_custom_call.1} parent=11 // pred_fallthru
          _
        // Predicated region
        $region17: #{tpu_custom_call.1} parent=11 // pred_check
          %p184 = pneg %p98
        $region18: #{tpu_custom_call.1} parent=11 // pred_check_branch
          %186 = sbr.rel (%p184) target = $region20
        $region19: #{tpu_custom_call.1} parent=11 // pred_region
          _
        $region20: #{tpu_custom_call.1} parent=11 // pred_fallthru
          _
        // Predicated region
        $region21: #{tpu_custom_call.1} parent=11 // pred_check
          %p187 = pneg %p119
        $region22: #{tpu_custom_call.1} parent=11 // pred_check_branch
          %189 = sbr.rel (%p187) target = $region24
        $region23: #{tpu_custom_call.1} parent=11 // pred_region
          _
        $region24: #{tpu_custom_call.1} parent=11 // pred_fallthru
          _
        // Predicated region
        $region25: #{tpu_custom_call.1} parent=11 // pred_check
          %p190 = pneg %p140
        $region26: #{tpu_custom_call.1} parent=11 // pred_check_branch
          %192 = sbr.rel (%p190) target = $region28
        $region27: #{tpu_custom_call.1} parent=11 // pred_region
          _
        $region28: #{tpu_custom_call.1} parent=11 // pred_fallthru
          _
      $region12: #{tpu_custom_call.1} parent=5 // pred_fallthru
        _
      %p193 = scmp.lt.s32.totalorder %s16, 2
      // Predicated region
      $region29: #{tpu_custom_call.1} parent=5 // pred_check
        %p194 = pneg %p193
      $region30: #{tpu_custom_call.1} parent=5 // pred_check_branch
        %196 = sbr.rel (%p194) target = $region32
      $region31: #{tpu_custom_call.1} parent=5 // pred_region
        // Predicated region
        $region33: #{tpu_custom_call.1} parent=31 // pred_check
          %p197 = pneg %p50
        $region34: #{tpu_custom_call.1} parent=31 // pred_check_branch
          %199 = sbr.rel (%p197) target = $region36
        $region35: #{tpu_custom_call.1} parent=31 // pred_region
          %s200 = sand.u32 %s40, 1
          %s201 = scalar_lea.sflag [#allocation5], %s200
          %s202 = sand.u32 %s40, 1
          %s203 = smul.addr %s202, 8
          %s204 = scalar_lea.vmem [#allocation4], %s203
          %s205 = smul.u32 2, %s24
          %207 = vsyncadd %s201, 0
          %s208 = smul.addr %s23, 2
          %s209 = sadd.s32 %s205, %s208
          %s210 = smul.addr %s209, 4
          %s211 = scalar_lea.hbm %s0, %s210
          %s213 = sshll.u32 %s211, 4
          %s214 = int_to_ptr.hbm [resolvable:$true] %s213
          %s215 = sshll.u32 %s204, 4
          %s216 = int_to_ptr.vmem [resolvable:$true] %s215
          %218 = dma.hbm_to_vmem [thread:$0]  %s214, 128, %s216, %s201
        $region36: #{tpu_custom_call.1} parent=31 // pred_fallthru
          _
      $region32: #{tpu_custom_call.1} parent=5 // pred_fallthru
        _
      %p219 = scmp.le.s32.totalorder 1, %s16
      %p220 = scmp.lt.s32.totalorder %s16, 3
      %p221 = pnand %p219, %p220
      %p222 = pneg %p221
      // Predicated region
      $region37: #{tpu_custom_call.1} parent=5 // pred_check
        _
      $region38: #{tpu_custom_call.1} parent=5 // pred_check_branch
        %224 = sbr.rel (%p221) target = $region40
      $region39: #{tpu_custom_call.1} parent=5 // pred_region
        %s225 = ssub.s32 %s16, 1
        %s226 = sand.u32 %s43, 1
        %s227 = scalar_lea.sflag [#allocation5], %s226
        %s228 = sand.u32 %s43, 1
        %s229 = smul.addr %s228, 8
        %s230 = scalar_lea.vmem [#allocation4], %s229
        // Predicated region
        $region41: #{tpu_custom_call.1} parent=39 // pred_check
          %p231 = pneg %p56
        $region42: #{tpu_custom_call.1} parent=39 // pred_check_branch
          %233 = sbr.rel (%p231) target = $region44
        $region43: #{tpu_custom_call.1} parent=39 // pred_region
          %235 = dma.done %s227, 128
        $region44: #{tpu_custom_call.1} parent=39 // pred_fallthru
          _
        %s236 = sand.u32 %s43, 1
        %s237 = scalar_lea.sflag [#allocation5], %s236
        %s238 = sand.u32 %s43, 1
        %s239 = smul.addr %s238, 8
        %s240 = scalar_lea.vmem [#allocation4], %s239
        %p241 = pneg %p56
        %p242 = pneg %p53
        %p243 = pneg %p77
        %p244 = pneg %p74
        %p245 = pneg %p98
        %p246 = pneg %p95
        %p247 = pneg %p119
        %p248 = pneg %p116
        %p249 = pneg %p140
        %p250 = pneg %p137
        %p251 = pneg %p166
        %p252 = pneg %p163
        %p253 = scmp.lt.s32.totalorder %s25, 1
        %s254 = scalar_select %p253, %s25, 1
        %s255 = smul.addr %s254, 4
        %s256 = scalar_lea.vmem %s5, %s255
        %s257 = smul.u32 2, %s26
        %p258 = scmp.lt.s32.totalorder %s25, 1
        %s259 = scalar_select %p258, %s25, 1
        %s260 = smul.addr %s259, 4
        %s261 = scalar_lea.vmem %s5, %s260
        %p262 = scmp.eq.s32.totalorder %s26, 0
        // Predicated region
        $region45: #{tpu_custom_call.1} parent=39 // pred_check
          %p263 = pneg %p262
        $region46: #{tpu_custom_call.1} parent=39 // pred_check_branch
          %265 = sbr.rel (%p263) target = $region48
        $region47: #{tpu_custom_call.1} parent=39 // pred_region
          %vm266 = vcmask 3072
          %267 = vst.msk [vmem:[#allocation2] sm:$0xf] %vm266, 0.0
        $region48: #{tpu_custom_call.1} parent=39 // pred_fallthru
          _
        %v268 = vld [vmem:[%s230] sm:$0xff]
        %v269 = vld [vmem:[#allocation2] sm:$0xf]
        %271 = vst [vmem:[#allocation1] ss:$2 sm:$0xff] %v268
        %v272 = vld.sshfl [vmem:[#allocation1] sm:$0xff pattern:$0x75316420]
        %v273 = vld.sshfl [vmem:[#allocation1 + $0x8] sm:$0xff pattern:$0x75316420]
        %vm276 = vcmask 1043456
        %v277 = vsel %vm276, %v272, 0.0
        %v278 = vsel %vm276, %v273, 0.0
        %v279 = vadd.f32 %v277, %v278
        %280 = vadd.xlane.f32.xlu0 %v279
        %v281 = vpop.xlane.xlu0 %280
        %v282 = vadd.f32 %v269, %v281
        %vm283 = vcmask 3072
        %284 = vst.msk [vmem:[#allocation2] sm:$0xf] %vm283, %v282
        // Predicated region
        $region49: #{tpu_custom_call.1} parent=39 // pred_check
          %p285 = pneg %p262
        $region50: #{tpu_custom_call.1} parent=39 // pred_check_branch
          %287 = sbr.rel (%p285) target = $region52
        $region51: #{tpu_custom_call.1} parent=39 // pred_region
          %v288 = vld [vmem:[#allocation2] sm:$0xf]
          %v289 = vmul.f32 %v288, 0.00390625
          %v290 = vld [vmem:[%s1] sm:$0x1]
          %v291 = vld [vmem:[#allocation3] sm:$0x1]
          %vm292 = vcmask 31744
          %v294 = vsel %vm292, %v290, 0
          %v297 = vsel %vm276, %v289, 0
          %299 = vmatpush.msra.mxu0 0.0
          %300 = vmatpush.msra.mxu0 0.0
          %301 = vmatpush.msra.mxu0 0.0
          %302 = vmatpush.msra.mxu0 0.0
          %303 = vmatpush.msra.mxu0 0.0
          %304 = vmatpush.msra.mxu0 0.0
          %305 = vmatpush.msra.mxu0 0.0
          %306 = vmatpush.msra.mxu0 0.0
          %307 = vmatpush.msra.mxu0 0.0
          %308 = vmatpush.msra.mxu0 0.0
          %309 = vmatpush.msra.mxu0 0.0
          %310 = vmatpush.msra.mxu0 0.0
          %311 = vmatpush.msra.mxu0 0.0
          %312 = vmatpush.msra.mxu0 0.0
          %313 = vmatpush.msra.mxu0 0.0
          %314 = vmatpush.msra.mxu0 %v297
          %315 = vmatmul.f32.gmra.mxu0 %v294
          %v316 = vpop.f32.mrf.mxu0
          %v317 = vadd.f32 %v291, %v316
          %318 = vdwg.mxu0
          %v319 = vmax.f32 %v317, 0.0
          %v320 = vld [vmem:[%s3] sm:$0xf]
          %v321 = vld [vmem:[%s4] sm:$0xf]
          %vm322 = vcmask 7168
          %v324 = vsel %vm322, %v320, 0
          %vm326 = vcmask 1040384
          %v328 = vsel %vm326, %v319, 0
          %330 = vmatpush.msra.mxu0 0.0
          %331 = vmatpush.msra.mxu0 0.0
          %332 = vmatpush.msra.mxu0 0.0
          %333 = vmatpush.msra.mxu0 0.0
          %334 = vmatpush.msra.mxu0 0.0
          %335 = vmatpush.msra.mxu0 0.0
          %336 = vmatpush.msra.mxu0 0.0
          %337 = vmatpush.msra.mxu0 0.0
          %338 = vmatpush.msra.mxu0 0.0
          %339 = vmatpush.msra.mxu0 0.0
          %340 = vmatpush.msra.mxu0 0.0
          %341 = vmatpush.msra.mxu0 0.0
          %342 = vmatpush.msra.mxu0 0.0
          %343 = vmatpush.msra.mxu0 0.0
          %344 = vmatpush.msra.mxu0 0.0
          %345 = vmatpush.msra.mxu0 %v328
          %346 = vmatmul.f32.gmra.mxu0 %v324
          %v347 = vpop.f32.mrf.mxu0
          %v348 = vadd.f32 %v321, %v347
          %349 = vdwg.mxu0
          %v350 = vxor.u32 %v348, 2147483648
          %v351 = vmul.f32 %v350, 1.442695
          %v352 = vpow.pop %v351
          %v353 = vadd.f32 %v352, 1.0
          %v354 = vrcp.pop %v353
          %v355 = vmul.f32 %v353, %v354
          %v356 = vsub.f32 1.0, %v355
          %v357 = vmul.f32 %v354, %v356
          %v358 = vadd.f32 %v354, %v357
          %vm359 = vweird.f32 %v353
          %vm360 = vweird.f32 %v354
          %vm361 = vmor %vm359, %vm360
          %v362 = vsel %vm361, %v354, %v358
          %v363 = vand.u32 2147483647, %v353
          %vm364 = vcmp.eq.f32.partialorder %v363, 8.507059e+37
          %v365 = vand.u32 %v353, 2147483648
          %v366 = vor.u32 1.1754944e-38, %v365
          %v367 = vsel %vm364, %v366, %v362
          %v368 = vmul.f32 1.0, %v367
          %369 = vst.msk [vmem:[%s261] sm:$0xf] %vm283, %v368
        $region52: #{tpu_custom_call.1} parent=39 // pred_fallthru
          _
        %p370 = scmp.lt.s32.totalorder %s25, 1
        %s371 = scalar_select %p370, %s25, 1
        %s372 = smul.addr %s371, 4
        %s373 = scalar_lea.vmem %s5, %s372
        // Predicated region
        $region53: #{tpu_custom_call.1} parent=39 // pred_check
          %p374 = pneg %p163
        $region54: #{tpu_custom_call.1} parent=39 // pred_check_branch
          %376 = sbr.rel (%p374) target = $region56
        $region55: #{tpu_custom_call.1} parent=39 // pred_region
          _
        $region56: #{tpu_custom_call.1} parent=39 // pred_fallthru
          _
      $region40: #{tpu_custom_call.1} parent=5 // pred_fallthru
        _
      %p377 = scmp.le.s32.totalorder 2, %s16
      // Predicated region
      $region57: #{tpu_custom_call.1} parent=5 // pred_check
        %p378 = pneg %p377
      $region58: #{tpu_custom_call.1} parent=5 // pred_check_branch
        %380 = sbr.rel (%p378) target = $region60
      $region59: #{tpu_custom_call.1} parent=5 // pred_region
        %s381 = ssub.s32 %s16, 2
        // Predicated region
        $region61: #{tpu_custom_call.1} parent=59 // pred_check
          %p382 = pneg %p169
        $region62: #{tpu_custom_call.1} parent=59 // pred_check_branch
          %384 = sbr.rel (%p382) target = $region64
        $region63: #{tpu_custom_call.1} parent=59 // pred_region
          %p385 = scmp.lt.s32.totalorder %s27, 1
          %s386 = scalar_select %p385, %s27, 1
          %s387 = smul.addr %s386, 4
          %s388 = scalar_lea.vmem %s5, %s387
        $region64: #{tpu_custom_call.1} parent=59 // pred_fallthru
          _
      $region60: #{tpu_custom_call.1} parent=5 // pred_fallthru
        _
    $region6: #{tpu_custom_call.1} parent=1 // loop_footer
      %s20 = sadd.s32 1, %s16
    $region7: #{tpu_custom_call.1} parent=1 // loop_footer_branch
      %15 = sbr.rel target = $region3
    $region8: #{tpu_custom_call.1} parent=1 // loop_exit
      _
    %389 = vsyncpa [#allocation5], 1
    %s390 = scalar_lea.sflag [#allocation5], 1
    %391 = vsyncpa %s390, 1

</llo_original>
